<compile_context>
chip_gen: v7x
topology: tpu7x:2x2x1
jax: 0.10.0
libtpu: 0.0.40
codegen_flags: <defaults>
</compile_context>

<pallas_src>
import functools

import jax
import jax.numpy as jnp
from jax.experimental import pallas as pl
from jax.experimental.pallas import tpu as pltpu

LANE = 128             # TPU lane width (last dim of every block)
MAX_TILE_ROWS = 8192   # (8192, 128) f32 block = 4 MiB per input per grid step
ACC_ROWS_MAX = 32      # accumulator height: 4 independent f32 vreg add chains


def _round_up(x, m):
    return (x + m - 1) // m * m


def _sublane_pack(dtype):
    # Rows per packed (sublane, lane) tile: 8 for 4-byte, 16 for 2-byte dtypes.
    return 8 * max(1, 4 // jnp.dtype(dtype).itemsize)


def _tensorcores_per_device():
    """Best-effort TensorCores-per-device; 1 is always a correct fallback."""
    try:
        kind = jax.devices()[0].device_kind.lower()
    except Exception:
        return 1
    if "v7" in kind or "7x" in kind:   # v7x: 2 TensorCores per chip
        return 2
    return 1                           # v5e / v6e: 1 TensorCore per chip


def _wmse_kernel(x_ref, t_ref, o_ref, acc_ref, *,
                 scale, pos_weight, rows_total, tile_rows, acc_rows,
                 blocks_per_core):
    c = pl.program_id(0)          # core (parallel) axis
    j = pl.program_id(1)          # streaming (reduction) axis

    @pl.when(j == 0)
    def _init():
        acc_ref[...] = jnp.zeros_like(acc_ref)

    x = x_ref[...].astype(jnp.float32)   # VPU cast; free vs. the HBM roofline
    t = t_ref[...].astype(jnp.float32)

    # weights = scale everywhere, scale * pos_weight where target == 1
    w = jnp.where(t == jnp.float32(1.0),
                  jnp.float32(scale * pos_weight),
                  jnp.float32(scale))
    d = x - t
    err = d * d * w

    # Scalar count of real-data rows in this logical block (<= 0 for the clamped
    # duplicate block a core with no remaining work is pointed at).  Full blocks
    # skip the mask math entirely; only tail/duplicate blocks pay for it.
    b = c * blocks_per_core + j
    rows_left = rows_total - b * tile_rows

    @pl.when(rows_left >= tile_rows)
    def _full_block():
        acc_ref[...] += jnp.sum(
            err.reshape(tile_rows // acc_rows, acc_rows, LANE), axis=0)

    @pl.when(rows_left < tile_rows)
    def _tail_block():
        row = jax.lax.broadcasted_iota(jnp.int32, err.shape, 0)
        masked = jnp.where(row < rows_left, err, jnp.float32(0.0))
        acc_ref[...] += jnp.sum(
            masked.reshape(tile_rows // acc_rows, acc_rows, LANE), axis=0)

    @pl.when(j == pl.num_programs(1) - 1)
    def _finalize():
        # Single cross-lane / cross-sublane reduce per core.
        o_ref[...] = jnp.sum(acc_ref[...], keepdims=True)


def weighted_mse_loss(inputs, targets, pos_weight=1.0, scale=100.0):
    """Pallas TPU implementation of weighted_MSELoss.forward (f32 scalar)."""
    assert inputs.shape == targets.shape, "inputs/targets must have same shape"
    n_valid = int(inputs.size)
    assert n_valid > 0

    def _canon(a):
        # Stream f32 / bf16 as-is (cast happens on the VPU in-kernel); anything
        # else (f64, ints, bool, ...) goes through f32 on the host since the
        # TPU vector path is 32-bit.
        if a.dtype in (jnp.dtype(jnp.float32), jnp.dtype(jnp.bfloat16)):
            return a.reshape(-1)
        return a.reshape(-1).astype(jnp.float32)

    x = _canon(inputs)
    t = _canon(targets)

    # View the flat data as a lane-dense (rows, 128) slab.
    # TODO(synk): the tail-row pad below copies the whole array (XLA has no
    #             views); it is only hit when numel % 128 != 0.
    rem = n_valid % LANE
    if rem:
        x = jnp.pad(x, (0, LANE - rem))
        t = jnp.pad(t, (0, LANE - rem))
    rows_total = x.size // LANE
    x2d = x.reshape(rows_total, LANE)
    t2d = t.reshape(rows_total, LANE)

    # Block height: as large as possible (amortise per-grid-step overhead) while
    # keeping 2 inputs x 2 pipeline buffers + elementwise temporaries well
    # inside every generation's VMEM.
    pack = max(_sublane_pack(x2d.dtype), _sublane_pack(t2d.dtype))
    tile_rows = min(MAX_TILE_ROWS, _round_up(rows_total, pack))

    # Accumulator height: as many independent add chains as the tile allows.
    acc_rows = min(ACC_ROWS_MAX, tile_rows)
    while tile_rows % acc_rows:
        acc_rows //= 2

    num_blocks = pl.cdiv(rows_total, tile_rows)

    # Right-size the scoped-VMEM limit: double-buffered native input blocks plus
    # headroom for the f32 elementwise temporaries; clamp to [16, 48] MiB so it
    # stays well inside v7x's 64 MiB physical VMEM and never starves the
    # compiler for small inputs.
    native_block = tile_rows * LANE * max(x2d.dtype.itemsize, t2d.dtype.itemsize)
    f32_block = tile_rows * LANE * 4
    vmem_limit = int(min(48 << 20,
                         max(16 << 20,
                             4 * native_block + 6 * f32_block + (2 << 20))))

    def _run(num_cores, leading_sem):
        blocks_per_core = pl.cdiv(num_blocks, num_cores)

        def block_index(c, j):
            # Clamp so a core with fewer (or no) real blocks re-reads the last
            # valid block instead of issuing an out-of-bounds DMA; the in-kernel
            # row mask zeroes that block's contribution.
            return (jnp.minimum(c * blocks_per_core + j, num_blocks - 1), 0)

        kernel = functools.partial(
            _wmse_kernel,
            scale=float(scale),
            pos_weight=float(pos_weight),
            rows_total=rows_total,
            tile_rows=tile_rows,
            acc_rows=acc_rows,
            blocks_per_core=blocks_per_core,
        )

        return pl.pallas_call(
            kernel,
            out_shape=jax.ShapeDtypeStruct((num_cores, 1), jnp.float32),
            grid_spec=pltpu.PrefetchScalarGridSpec(
                num_scalar_prefetch=0,
                grid=(num_cores, blocks_per_core),
                in_specs=[
                    pl.BlockSpec((tile_rows, LANE), block_index),
                    pl.BlockSpec((tile_rows, LANE), block_index),
                ],
                out_specs=pl.BlockSpec((1, 1), lambda c, j: (c, 0)),
                scratch_shapes=[pltpu.VMEM((acc_rows, LANE), jnp.float32)],
            ),
            compiler_params=pltpu.CompilerParams(
                dimension_semantics=(leading_sem, pltpu.ARBITRARY),
                vmem_limit_bytes=vmem_limit,
            ),
        )(x2d, t2d)

    num_cores = _tensorcores_per_device()
    if num_cores > 1:
        # 2-TC chips (v7x): genuinely shard the reduction across TensorCores.
        # Fall back to the (always correct) single-core path if the
        # core-parallel lowering is unavailable on this chip/runtime.
        try:
            partials = _run(num_cores, pltpu.CORE_PARALLEL)
        except Exception:
            partials = _run(1, pltpu.ARBITRARY)
    else:
        # 1-TC chips (v5e/v6e): no split -> no clamped duplicate-block traffic.
        partials = _run(1, pltpu.ARBITRARY)

    # mean = (sum of per-core partial sums) / ORIGINAL element count
    return jnp.sum(partials) / jnp.float32(n_valid)


def _reference(inputs, targets, pos_weight=1.0, scale=100.0):
    """Pure-JAX reference mirroring the PyTorch forward (in f32)."""
    x = inputs.astype(jnp.float32)
    t = targets.astype(jnp.float32)
    w = jnp.where(t == 1.0, scale * pos_weight, scale)
    return jnp.mean((x - t) ** 2 * w)


if __name__ == "__main__":
    key = jax.random.PRNGKey(0)
    k1, k2 = jax.random.split(key)

    # Small shapes consistent with the module: predictions / binary-ish targets.
    batch, channels, h, w = 2, 4, 16, 16
    inputs = jax.random.uniform(k1, (batch, channels, h, w), dtype=jnp.float32)
    # targets contain some exact 1.0 entries so the pos_weight branch is exercised
    targets = (jax.random.uniform(k2, (batch, channels, h, w)) > 0.7).astype(jnp.float32)

    pos_weight = 5.0

    loss = weighted_mse_loss(inputs, targets, pos_weight=pos_weight)
    loss = jax.block_until_ready(loss)

    ref = _reference(inputs, targets, pos_weight=pos_weight)
    assert jnp.allclose(loss, ref, rtol=1e-5, atol=1e-5), (loss, ref)

    print("KERNEL_OK")
</pallas_src>

<mosaic_0001>
module attributes {stable_mosaic.version = 11 : i64} {
  func.func @_wmse_kernel(%arg0: i32, %arg1: i32, %arg2: memref<16x128xf32, #tpu.memory_space<vmem>>, %arg3: memref<16x128xf32, #tpu.memory_space<vmem>>, %arg4: memref<1x1xf32, #tpu.memory_space<vmem>>, %arg5: memref<16x128xf32, #tpu.memory_space<vmem>>) attributes {dimension_semantics = [#tpu.dimension_semantics<arbitrary>, #tpu.dimension_semantics<arbitrary>], iteration_bounds = array<i64: 1, 1>, scalar_prefetch = 0 : i64, scratch_operands = 1 : i64, tpu.core_type = #tpu.core_type<tc>, window_params = [{transform_indices = @transform_0, window_bounds = array<i64: 16, 128>}, {transform_indices = @transform_1, window_bounds = array<i64: 16, 128>}, {transform_indices = @transform_2, window_bounds = array<i64: 1, 1>}]} {
    %c0_i32 = arith.constant 0 : i32
    %0 = arith.cmpi eq, %arg1, %c0_i32 : i32
    %1 = arith.extui %0 : i1 to i32
    %c0_i32_0 = arith.constant 0 : i32
    %2 = arith.cmpi ne, %1, %c0_i32_0 : i32
    scf.if %2 {
      %cst_13 = arith.constant 0.000000e+00 : f32
      %26 = vector.broadcast %cst_13 : f32 to vector<16x128xf32>
      %c0_14 = arith.constant 0 : index
      %c0_15 = arith.constant 0 : index
      %27 = vector.load %arg5[%c0_14, %c0_15] : memref<16x128xf32, #tpu.memory_space<vmem>>, vector<16x128xf32>
      tpu.vector_store %arg5[%c0_14, %c0_15], %26 {strides = array<i32>} : memref<16x128xf32, #tpu.memory_space<vmem>>, vector<16x128xf32>,
    } else {
    }
    %c0 = arith.constant 0 : index
    %c0_1 = arith.constant 0 : index
    %3 = vector.load %arg2[%c0, %c0_1] : memref<16x128xf32, #tpu.memory_space<vmem>>, vector<16x128xf32>
    %c0_2 = arith.constant 0 : index
    %c0_3 = arith.constant 0 : index
    %4 = vector.load %arg3[%c0_2, %c0_3] : memref<16x128xf32, #tpu.memory_space<vmem>>, vector<16x128xf32>
    %cst = arith.constant 1.000000e+00 : f32
    %5 = vector.broadcast %cst : f32 to vector<16x128xf32>
    %6 = arith.cmpf oeq, %4, %5 : vector<16x128xf32>
    %cst_4 = arith.constant 5.000000e+02 : f32
    %cst_5 = arith.constant 1.000000e+02 : f32
    %7 = vector.broadcast %cst_4 : f32 to vector<16x128xf32>
    %8 = vector.broadcast %cst_5 : f32 to vector<16x128xf32>
    %9 = arith.select %6, %7, %8 : vector<16x128xi1>, vector<16x128xf32>
    %10 = arith.subf %3, %4 : vector<16x128xf32>
    %11 = arith.mulf %10, %10 : vector<16x128xf32>
    %12 = arith.mulf %11, %9 : vector<16x128xf32>
    %c1_i32 = arith.constant 1 : i32
    %13 = arith.muli %arg0, %c1_i32 : i32
    %14 = arith.addi %13, %arg1 : i32
    %c16_i32 = arith.constant 16 : i32
    %15 = arith.muli %14, %c16_i32 : i32
    %c16_i32_6 = arith.constant 16 : i32
    %16 = arith.subi %c16_i32_6, %15 : i32
    %c16_i32_7 = arith.constant 16 : i32
    %17 = arith.cmpi sge, %16, %c16_i32_7 : i32
    %18 = arith.extui %17 : i1 to i32
    %c0_i32_8 = arith.constant 0 : i32
    %19 = arith.cmpi ne, %18, %c0_i32_8 : i32
    scf.if %19 {
      %c0_13 = arith.constant 0 : index
      %c0_14 = arith.constant 0 : index
      %26 = vector.load %arg5[%c0_13, %c0_14] : memref<16x128xf32, #tpu.memory_space<vmem>>, vector<16x128xf32>
      %27 = vector.shape_cast %12 : vector<16x128xf32> to vector<1x16x128xf32>
      %cst_15 = arith.constant dense<0.000000e+00> : vector<16x128xf32>
      %28 = vector.multi_reduction <add>, %27, %cst_15 [0] : vector<1x16x128xf32> to vector<16x128xf32>
      %29 = arith.addf %26, %28 : vector<16x128xf32>
      %c0_16 = arith.constant 0 : index
      %c0_17 = arith.constant 0 : index
      %30 = vector.load %arg5[%c0_16, %c0_17] : memref<16x128xf32, #tpu.memory_space<vmem>>, vector<16x128xf32>
      tpu.vector_store %arg5[%c0_16, %c0_17], %29 {strides = array<i32>} : memref<16x128xf32, #tpu.memory_space<vmem>>, vector<16x128xf32>,
    } else {
    }
    %c16_i32_9 = arith.constant 16 : i32
    %20 = arith.cmpi slt, %16, %c16_i32_9 : i32
    %21 = arith.extui %20 : i1 to i32
    %c0_i32_10 = arith.constant 0 : i32
    %22 = arith.cmpi ne, %21, %c0_i32_10 : i32
    scf.if %22 {
      %26 = tpu.iota {dimensions = array<i32: 0>} : vector<16x128xi32>
      %27 = vector.broadcast %16 : i32 to vector<16x128xi32>
      %28 = arith.cmpi slt, %26, %27 : vector<16x128xi32>
      %cst_13 = arith.constant 0.000000e+00 : f32
      %29 = vector.broadcast %cst_13 : f32 to vector<16x128xf32>
      %30 = arith.select %28, %12, %29 : vector<16x128xi1>, vector<16x128xf32>
      %c0_14 = arith.constant 0 : index
      %c0_15 = arith.constant 0 : index
      %31 = vector.load %arg5[%c0_14, %c0_15] : memref<16x128xf32, #tpu.memory_space<vmem>>, vector<16x128xf32>
      %32 = vector.shape_cast %30 : vector<16x128xf32> to vector<1x16x128xf32>
      %cst_16 = arith.constant dense<0.000000e+00> : vector<16x128xf32>
      %33 = vector.multi_reduction <add>, %32, %cst_16 [0] : vector<1x16x128xf32> to vector<16x128xf32>
      %34 = arith.addf %31, %33 : vector<16x128xf32>
      %c0_17 = arith.constant 0 : index
      %c0_18 = arith.constant 0 : index
      %35 = vector.load %arg5[%c0_17, %c0_18] : memref<16x128xf32, #tpu.memory_space<vmem>>, vector<16x128xf32>
      tpu.vector_store %arg5[%c0_17, %c0_18], %34 {strides = array<i32>} : memref<16x128xf32, #tpu.memory_space<vmem>>, vector<16x128xf32>,
    } else {
    }
    %c0_i32_11 = arith.constant 0 : i32
    %23 = arith.cmpi eq, %arg1, %c0_i32_11 : i32
    %24 = arith.extui %23 : i1 to i32
    %c0_i32_12 = arith.constant 0 : i32
    %25 = arith.cmpi ne, %24, %c0_i32_12 : i32
    scf.if %25 {
      %c0_13 = arith.constant 0 : index
      %c0_14 = arith.constant 0 : index
      %26 = vector.load %arg5[%c0_13, %c0_14] : memref<16x128xf32, #tpu.memory_space<vmem>>, vector<16x128xf32>
      %27 = vector.shape_cast %26 : vector<16x128xf32> to vector<1x16x128xf32>
      %cst_15 = arith.constant dense<0.000000e+00> : vector<1xf32>
      %28 = vector.multi_reduction <add>, %27, %cst_15 [1, 2] : vector<1x16x128xf32> to vector<1xf32>
      %29 = vector.shape_cast %28 : vector<1xf32> to vector<1x1x1xf32>
      %30 = vector.extract %29[0, 0, 0] : f32 from vector<1x1x1xf32>
      %31 = vector.broadcast %30 : f32 to vector<1x1xf32>
      %c0_16 = arith.constant 0 : index
      %c0_17 = arith.constant 0 : index
      %32 = vector.load %arg4[%c0_16, %c0_17] : memref<1x1xf32, #tpu.memory_space<vmem>>, vector<1x1xf32>
      tpu.vector_store %arg4[%c0_16, %c0_17], %31 {strides = array<i32>} : memref<1x1xf32, #tpu.memory_space<vmem>>, vector<1x1xf32>,
    } else {
    }
    return
  }
  func.func @transform_0(%arg0: i32, %arg1: i32) -> (i32, i32) {
    %c1_i32 = arith.constant 1 : i32
    %0 = arith.muli %arg0, %c1_i32 : i32
    %1 = arith.addi %0, %arg1 : i32
    %c0_i32 = arith.constant 0 : i32
    %2 = arith.minsi %1, %c0_i32 : i32
    %c0_i32_0 = arith.constant 0 : i32
    %c0_i32_1 = arith.constant 0 : i32
    return %2, %c0_i32_0 : i32, i32
  }
  func.func @transform_1(%arg0: i32, %arg1: i32) -> (i32, i32) {
    %c1_i32 = arith.constant 1 : i32
    %0 = arith.muli %arg0, %c1_i32 : i32
    %1 = arith.addi %0, %arg1 : i32
    %c0_i32 = arith.constant 0 : i32
    %2 = arith.minsi %1, %c0_i32 : i32
    %c0_i32_0 = arith.constant 0 : i32
    %c0_i32_1 = arith.constant 0 : i32
    return %2, %c0_i32_0 : i32, i32
  }
  func.func @transform_2(%arg0: i32, %arg1: i32) -> (i32, i32) {
    %c0_i32 = arith.constant 0 : i32
    %c0_i32_0 = arith.constant 0 : i32
    return %arg0, %c0_i32 : i32, i32
  }
}

</mosaic_0001>

<llo_original>
// kernel: tpu_custom_call.1
$region0: #{tpu_custom_call.1}
  #allocation0 [shape = 'u32[]', space=smem, size = 0x4, offset = 0x4, fixed_abs, tag = 'smem constant byte address 0x4 - core index']
  #allocation1 [shape = 'u32[144,128]{1,0:T(1,128)}', space=vmem, size = 0x12000, scoped, tag = 'internal scratch']
  #allocation2 [shape = 'f32[16,128]{1,0:T(8,128)}', space=vmem, size = 0x2000, scoped, tag = 'scratch operand']
  %s0 = inlined_call_operand.hbm [shape: f32[16,128], index: 0, kind: input, shape index: {}]
  %s1 = inlined_call_operand.hbm [shape: f32[16,128], index: 1, kind: input, shape index: {}]
  %s2 = inlined_call_operand.hbm [shape: f32[1,1], index: 2, kind: output, shape index: {}]
  %s3 = sld [smem:[#allocation0]]
  $region42: #{tpu_custom_call.1} parent=0
    _
  %s5 = ssub.s32 1, %s3
  %s6 = scalar_select 0, %s5, %s3
  $region1: #{tpu_custom_call.1} parent=0
    #allocation3 [shape = 'u8[8192]{0}', space=vmem, size = 0x2000, scoped, tag = 'input window, operand 0, single buffered']
    #allocation4 [shape = 's32[1]{0}', space=sflag, size = 0x4, scoped, tag = 'scoped memory for tpu_custom_call.1']
    #allocation5 [shape = 's32[1]{0}', space=sflag, size = 0x4, scoped, tag = 'scoped memory for tpu_custom_call.1']
    #allocation6 [shape = 'u8[8192]{0}', space=vmem, size = 0x2000, scoped, tag = 'input window, operand 1, single buffered']
    #allocation7 [shape = 's32[1]{0}', space=sflag, size = 0x4, scoped, tag = 'scoped memory for tpu_custom_call.1']
    #allocation8 [shape = 'u8[512]{0}', space=vmem, size = 0x400, scoped, tag = 'output window, operand 0, single buffered']
    %7 = vsyncpa [#allocation4], 0
    %8 = vsyncpa [#allocation7], 0
    %9 = vsyncpa [#allocation5], 0
    // Predicated region
    $region2: #{tpu_custom_call.1} parent=1 // pred_check
      _
    $region3: #{tpu_custom_call.1} parent=1 // pred_check_branch
      %11 = sbr.rel (0) target = $region5
    $region4: #{tpu_custom_call.1} parent=1 // pred_region
      %s12 = sadd.s32 0, 0
      %p13 = scmp.lt.s32.totalorder %s12, 0
      %s14 = scalar_select %p13, %s12, 0
      %s15 = smul.u32 2, %s14
      %s17 = ssub.s32 256, 256
      %18 = vsyncadd [#allocation4], %s17
      %s19 = smul.addr %s15, 128
      %s20 = scalar_lea.hbm %s0, %s19
      %s21 = sshll.u32 [#allocation3], 4
      %s22 = int_to_ptr.vmem [resolvable:$true] %s21
      %27 = dma.hbm_to_vmem [thread:$0]  %s20, 256, %s22, [#allocation4], 128, 128, 8
    $region5: #{tpu_custom_call.1} parent=1 // pred_fallthru
      _
    // Predicated region
    $region6: #{tpu_custom_call.1} parent=1 // pred_check
      _
    $region7: #{tpu_custom_call.1} parent=1 // pred_check_branch
      %29 = sbr.rel (0) target = $region9
    $region8: #{tpu_custom_call.1} parent=1 // pred_region
      %s30 = sadd.s32 0, 0
      %p31 = scmp.lt.s32.totalorder %s30, 0
      %s32 = scalar_select %p31, %s30, 0
      %s33 = smul.u32 2, %s32
      %s35 = ssub.s32 256, 256
      %36 = vsyncadd [#allocation7], %s35
      %s37 = smul.addr %s33, 128
      %s38 = scalar_lea.hbm %s1, %s37
      %s39 = sshll.u32 [#allocation6], 4
      %s40 = int_to_ptr.vmem [resolvable:$true] %s39
      %45 = dma.hbm_to_vmem [thread:$0]  %s38, 256, %s40, [#allocation7], 128, 128, 8
    $region9: #{tpu_custom_call.1} parent=1 // pred_fallthru
      _
    // Predicated region
    $region10: #{tpu_custom_call.1} parent=1 // pred_check
      _
    $region11: #{tpu_custom_call.1} parent=1 // pred_check_branch
      %47 = sbr.rel (0) target = $region13
    $region12: #{tpu_custom_call.1} parent=1 // pred_region
      %48 = dma.done [#allocation4], 256
    $region13: #{tpu_custom_call.1} parent=1 // pred_fallthru
      _
    // Predicated region
    $region14: #{tpu_custom_call.1} parent=1 // pred_check
      _
    $region15: #{tpu_custom_call.1} parent=1 // pred_check_branch
      %50 = sbr.rel (0) target = $region17
    $region16: #{tpu_custom_call.1} parent=1 // pred_region
      %51 = dma.done [#allocation7], 256
    $region17: #{tpu_custom_call.1} parent=1 // pred_fallthru
      _
    %s52 = sadd.s32 0, 0
    %p53 = scmp.lt.s32.totalorder %s52, 0
    %s54 = scalar_select %p53, %s52, 0
    %s55 = smul.u32 2, %s54
    %s56 = sadd.s32 0, 0
    %p57 = scmp.lt.s32.totalorder %s56, 0
    %s58 = scalar_select %p57, %s56, 0
    %s59 = smul.u32 2, %s58
    %p60 = scmp.eq.s32.totalorder 0, 0
    // Predicated region
    $region18: #{tpu_custom_call.1} parent=1 // pred_check
      %p61 = pneg %p60
    $region19: #{tpu_custom_call.1} parent=1 // pred_check_branch
      %63 = sbr.rel (%p61) target = $region21
    $region20: #{tpu_custom_call.1} parent=1 // pred_region
      %64 = vst [vmem:[#allocation2] sm:$0xff] 0.0
      %65 = vst [vmem:[#allocation2 + $0x8] sm:$0xff] 0.0
    $region21: #{tpu_custom_call.1} parent=1 // pred_fallthru
      _
    %v66 = vld [vmem:[#allocation3] sm:$0xff]
    %v67 = vld [vmem:[#allocation3 + $0x8] sm:$0xff]
    %v68 = vld [vmem:[#allocation6] sm:$0xff]
    %v69 = vld [vmem:[#allocation6 + $0x8] sm:$0xff]
    %vm70 = vcmp.eq.f32.partialorder %v68, 1.0
    %vm71 = vcmp.eq.f32.partialorder %v69, 1.0
    %v72 = vsel %vm70, 500.0, 100.0
    %v73 = vsel %vm71, 500.0, 100.0
    %v74 = vsub.f32 %v66, %v68
    %v75 = vsub.f32 %v67, %v69
    %v76 = vmul.f32 %v74, %v74
    %v77 = vmul.f32 %v75, %v75
    %v78 = vmul.f32 %v76, %v72
    %v79 = vmul.f32 %v77, %v73
    %s80 = sadd.s32 0, 0
    %s81 = smul.u32 %s80, 16
    %s82 = ssub.s32 16, %s81
    %p83 = scmp.ge.s32.totalorder %s82, 16
    // Predicated region
    $region22: #{tpu_custom_call.1} parent=1 // pred_check
      %p84 = pneg %p83
    $region23: #{tpu_custom_call.1} parent=1 // pred_check_branch
      %86 = sbr.rel (%p84) target = $region25
    $region24: #{tpu_custom_call.1} parent=1 // pred_region
      %v87 = vld [vmem:[#allocation2] sm:$0xff]
      %v88 = vld [vmem:[#allocation2 + $0x8] sm:$0xff]
      %v89 = vadd.f32 %v78, 0.0
      %v90 = vadd.f32 %v79, 0.0
      %v91 = vadd.f32 %v87, %v89
      %v92 = vadd.f32 %v88, %v90
      %93 = vst [vmem:[#allocation2] sm:$0xff] %v91
      %94 = vst [vmem:[#allocation2 + $0x8] sm:$0xff] %v92
    $region25: #{tpu_custom_call.1} parent=1 // pred_fallthru
      _
    %p95 = scmp.lt.s32.totalorder %s82, 16
    // Predicated region
    $region26: #{tpu_custom_call.1} parent=1 // pred_check
      %p96 = pneg %p95
    $region27: #{tpu_custom_call.1} parent=1 // pred_check_branch
      %98 = sbr.rel (%p96) target = $region29
    $region28: #{tpu_custom_call.1} parent=1 // pred_region
      %v99 = vlaneseq
      %v100 = vshrl.u32 %v99, 7
      %v101 = vadd.s32 %v100, 8
      %v102 = vstv %s82
      %vm103 = vcmp.lt.s32.totalorder %v100, %v102
      %vm104 = vcmp.lt.s32.totalorder %v101, %v102
      %v105 = vsel %vm103, %v78, 0.0
      %v106 = vsel %vm104, %v79, 0.0
      %v107 = vld [vmem:[#allocation2] sm:$0xff]
      %v108 = vld [vmem:[#allocation2 + $0x8] sm:$0xff]
      %v109 = vadd.f32 %v105, 0.0
      %v110 = vadd.f32 %v106, 0.0
      %v111 = vadd.f32 %v107, %v109
      %v112 = vadd.f32 %v108, %v110
      %113 = vst [vmem:[#allocation2] sm:$0xff] %v111
      %114 = vst [vmem:[#allocation2 + $0x8] sm:$0xff] %v112
    $region29: #{tpu_custom_call.1} parent=1 // pred_fallthru
      _
    // Predicated region
    $region30: #{tpu_custom_call.1} parent=1 // pred_check
      %p115 = pneg %p60
    $region31: #{tpu_custom_call.1} parent=1 // pred_check_branch
      %117 = sbr.rel (%p115) target = $region33
    $region32: #{tpu_custom_call.1} parent=1 // pred_region
      %v118 = vld [vmem:[#allocation2] sm:$0xff]
      %v119 = vld [vmem:[#allocation2 + $0x8] sm:$0xff]
      %v120 = vadd.f32 %v118, %v119
      %121 = vadd.xlane.f32.xlu0 %v120
      %v122 = vpop.xlane.xlu0 %121
      %v123 = vrot.slane %v122, 4
      %v124 = vadd.f32 %v122, %v123
      %v125 = vrot.slane %v124, 2
      %v126 = vadd.f32 %v124, %v125
      %v127 = vrot.slane %v126, 1
      %v128 = vadd.f32 %v126, %v127
      %s129 = vtos %v128
      %v130 = vstv %s129
      %vm131 = vcmask 0
      %132 = vst.msk [vmem:[#allocation8] sm:$0x1] %vm131, %v130
    $region33: #{tpu_custom_call.1} parent=1 // pred_fallthru
      _
    // Predicated region
    $region34: #{tpu_custom_call.1} parent=1 // pred_check
      _
    $region35: #{tpu_custom_call.1} parent=1 // pred_check_branch
      %134 = sbr.rel (0) target = $region37
    $region36: #{tpu_custom_call.1} parent=1 // pred_region
      %s136 = ssub.s32 16, 16
      %137 = vsyncadd [#allocation5], %s136
      %s139 = sshll.u32 [#allocation8], 4
      %s140 = int_to_ptr.vmem [resolvable:$true] %s139
      %142 = dma.vmem_to_hbm [thread:$0]  %s140, 16, %s2, [#allocation5]
    $region37: #{tpu_custom_call.1} parent=1 // pred_fallthru
      _
    // Predicated region
    $region38: #{tpu_custom_call.1} parent=1 // pred_check
      _
    $region39: #{tpu_custom_call.1} parent=1 // pred_check_branch
      %144 = sbr.rel (0) target = $region41
    $region40: #{tpu_custom_call.1} parent=1 // pred_region
      %145 = dma.done [#allocation5], 16
    $region41: #{tpu_custom_call.1} parent=1 // pred_fallthru
      _
    %146 = vsyncpa [#allocation4], 1
    %147 = vsyncpa [#allocation7], 1
    %148 = vsyncpa [#allocation5], 1

</llo_original>
